<compile_context>
chip_gen: v7x
topology: tpu7x:2x2x1
jax: 0.10.0
libtpu: 0.0.40
codegen_flags: <defaults>
</compile_context>

<pallas_src>
import numpy as np
import jax
import jax.numpy as jnp
from jax import lax
from jax.experimental import pallas as pl
from jax.experimental.pallas import tpu as pltpu

LANE = 128                         # lane width (last dim of every tile)
ACC_SUB = 8                        # f32 sublane count of one accumulator vreg
CHUNK_ROWS = 64                    # rows per inner chunk (8 f32 vregs / input)
TARGET_BLOCK_BYTES = 2 * 1024 * 1024   # ~2 MiB per input block per grid step
VMEM_LIMIT_BYTES = 32 * 1024 * 1024    # 2 inputs x 2 bufs x 2 MiB << limit
EPS = 1e-8


def _cdiv(a, b):
    return (a + b - 1) // b


def _sublane_packing(dtype) -> int:
    """Second-minor tile granularity for this dtype: 8 (32-bit), 16 (16-bit), 32 (8-bit)."""
    itemsize = jnp.dtype(dtype).itemsize
    return max(ACC_SUB, (4 // itemsize) * ACC_SUB)


def _make_ccc_kernel(n_total: int, rows: int, tile_r: int, grid_n: int):
    inv_n = 1.0 / float(n_total)
    last_rows = rows - (grid_n - 1) * tile_r   # static: valid rows in last block

    def ccc_kernel(yp_ref, yt_ref, out_ref, acc_ref):
        i = pl.program_id(0)

        @pl.when(i == 0)
        def _init():
            acc_ref[...] = jnp.zeros_like(acc_ref)

        def load(ref, off, nr):
            # Widen after the DMA; HBM traffic stays in the caller's dtype.
            return ref[pl.ds(off, nr), :].astype(jnp.float32)

        def add_stats(yp, yt):
            # yp/yt: (8*g, 128) f32.  Fold each statistic to one (8,128) vreg
            # and accumulate -- pure VPU work, no per-step cross-lane reduce.
            g = yp.shape[0] // ACC_SUB

            def fold(x):
                if g == 1:
                    return x
                return jnp.sum(x.reshape(g, ACC_SUB, LANE), axis=0)

            acc_ref[0] += fold(yp)            # sum(y_pred)
            acc_ref[1] += fold(yt)            # sum(y_true)
            acc_ref[2] += fold(yp * yp)       # sum(y_pred^2)
            acc_ref[3] += fold(yt * yt)       # sum(y_true^2)
            acc_ref[4] += fold(yp * yt)       # sum(y_pred * y_true)

        def process_rows(nrows):
            # nrows: static number of valid rows in this block.
            n_chunks = nrows // CHUNK_ROWS
            rem = nrows - n_chunks * CHUNK_ROWS
            rem8 = (rem // ACC_SUB) * ACC_SUB
            tail = rem - rem8

            if n_chunks == 1:
                add_stats(load(yp_ref, 0, CHUNK_ROWS), load(yt_ref, 0, CHUNK_ROWS))
            elif n_chunks > 1:
                def body(c, carry):
                    off = pl.multiple_of(c * CHUNK_ROWS, CHUNK_ROWS)
                    add_stats(load(yp_ref, off, CHUNK_ROWS),
                              load(yt_ref, off, CHUNK_ROWS))
                    return carry
                lax.fori_loop(0, n_chunks, body, 0, unroll=2)

            if rem8 > 0:
                off = n_chunks * CHUNK_ROWS
                add_stats(load(yp_ref, off, rem8), load(yt_ref, off, rem8))

            if tail > 0:
                # 1..7 leftover rows: zero-extend to a full sublane group
                # (zero rows are neutral for every accumulated statistic).
                off = n_chunks * CHUNK_ROWS + rem8
                zpad = jnp.zeros((ACC_SUB - tail, LANE), jnp.float32)
                yp_t = jnp.concatenate([load(yp_ref, off, tail), zpad], axis=0)
                yt_t = jnp.concatenate([load(yt_ref, off, tail), zpad], axis=0)
                add_stats(yp_t, yt_t)

        if last_rows == tile_r:
            # Every block (possibly the only one) is full.
            process_rows(tile_r)
        else:
            @pl.when(i < grid_n - 1)
            def _full_block():
                process_rows(tile_r)

            @pl.when(i == grid_n - 1)
            def _partial_last_block():
                process_rows(last_rows)

        @pl.when(i == pl.num_programs(0) - 1)
        def _finalize():
            sum_p = jnp.sum(acc_ref[0])
            sum_t = jnp.sum(acc_ref[1])
            sum_pp = jnp.sum(acc_ref[2])
            sum_tt = jnp.sum(acc_ref[3])
            sum_pt = jnp.sum(acc_ref[4])

            mean_p = sum_p * inv_n
            mean_t = sum_t * inv_n
            var_p = sum_pp * inv_n - mean_p * mean_p   # biased (population)
            var_t = sum_tt * inv_n - mean_t * mean_t   # biased (population)
            cov = sum_pt * inv_n - mean_p * mean_t
            ccc = 2.0 * cov / (var_t + var_p + (mean_t - mean_p) ** 2 + EPS)
            out_ref[0, 0] = 1.0 - ccc

    return ccc_kernel


def ccc_loss(y_pred, y_true, *, max_tile_rows=None):
    assert y_pred.shape == y_true.shape, "y_pred and y_true must have the same shape"
    assert y_pred.dtype == y_true.dtype, "y_pred and y_true must have the same dtype"
    n_total = int(np.prod(y_pred.shape))
    assert n_total > 0, "inputs must be non-empty"

    dtype = y_pred.dtype
    itemsize = jnp.dtype(dtype).itemsize
    sub = _sublane_packing(dtype)

    rows = _cdiv(n_total, LANE)
    lane_pad = rows * LANE - n_total

    def prep(x):
        flat = jnp.ravel(x)                       # keep HBM dtype narrow
        if lane_pad:
            # Only non-128-aligned sizes pay this (small, sum-neutral) pad.
            flat = jnp.pad(flat, (0, lane_pad))
        return jnp.reshape(flat, (rows, LANE))

    # Row tile: ~2 MiB per input block (amortizes per-step overhead), rounded
    # to the dtype's sublane packing; or the whole array if it is smaller.
    tile_cap = TARGET_BLOCK_BYTES // (LANE * itemsize)
    if max_tile_rows is not None:
        tile_cap = max(sub, (max_tile_rows // sub) * sub)
    if rows <= tile_cap:
        tile_r, grid_n = rows, 1                  # single full-extent block
    else:
        tile_r = (tile_cap // sub) * sub
        grid_n = _cdiv(rows, tile_r)

    yp2d = prep(y_pred)
    yt2d = prep(y_true)

    out = pl.pallas_call(
        _make_ccc_kernel(n_total, rows, tile_r, grid_n),
        out_shape=jax.ShapeDtypeStruct((1, 1), jnp.float32),
        grid_spec=pltpu.PrefetchScalarGridSpec(
            num_scalar_prefetch=0,
            grid=(grid_n,),
            in_specs=[
                pl.BlockSpec((tile_r, LANE), lambda i: (i, 0)),
                pl.BlockSpec((tile_r, LANE), lambda i: (i, 0)),
            ],
            out_specs=pl.BlockSpec(memory_space=pltpu.MemorySpace.SMEM),
            scratch_shapes=[pltpu.VMEM((5, ACC_SUB, LANE), jnp.float32)],
        ),
        compiler_params=pltpu.CompilerParams(
            dimension_semantics=("arbitrary",),   # accumulator carried across grid
            vmem_limit_bytes=VMEM_LIMIT_BYTES,
        ),
    )(yp2d, yt2d)
    return out[0, 0]


def ccc_loss_ref(y_pred, y_true):
    y_pred = jnp.ravel(y_pred).astype(jnp.float32)
    y_true = jnp.ravel(y_true).astype(jnp.float32)
    mt = jnp.mean(y_true)
    mp = jnp.mean(y_pred)
    vt = jnp.var(y_true)
    vp = jnp.var(y_pred)
    cov = jnp.mean((y_true - mt) * (y_pred - mp))
    ccc = 2 * cov / (vt + vp + (mt - mp) ** 2 + 1e-8)
    return 1 - ccc


if __name__ == "__main__":
    key = jax.random.PRNGKey(0)
    k1, k2, k3, k4 = jax.random.split(key, 4)

    def check(loss, ref, label):
        loss = np.asarray(jax.block_until_ready(loss))
        ref = np.asarray(ref)
        assert np.allclose(loss, ref, rtol=1e-4, atol=1e-5), (
            f"mismatch ({label}): pallas={loss} ref={ref}")

    # 1) Common 128-aligned case (zero-copy wrapper path): (2,4,16,16) = 2048.
    shape = (2, 4, 16, 16)
    y_true = jax.random.normal(k1, shape, dtype=jnp.float32)
    y_pred = 0.8 * y_true + 0.3 * jax.random.normal(k2, shape, dtype=jnp.float32) + 0.1
    ref = ccc_loss_ref(y_pred, y_true)
    check(ccc_loss(y_pred, y_true), ref, "aligned single-block")

    # 2) Multi-block accumulation with a partial last block: (2,4,16,20) = 2560
    #    elements -> 20 rows, forced 8-row tiles -> grid of 3, 4-row last block.
    shape_m = (2, 4, 16, 20)
    y_true_m = jax.random.normal(k3, shape_m, dtype=jnp.float32) + 0.25
    y_pred_m = 0.9 * y_true_m + 0.2 * jax.random.normal(k4, shape_m, dtype=jnp.float32)
    ref_m = ccc_loss_ref(y_pred_m, y_true_m)
    check(ccc_loss(y_pred_m, y_true_m, max_tile_rows=8), ref_m, "multi-block partial")

    # 3) Non-128-aligned element count (small pad + sub-8-row tail): 3*5*7*11 = 1155.
    shape_r = (3, 5, 7, 11)
    y_true_r = jax.random.normal(k3, shape_r, dtype=jnp.float32) + 0.5
    y_pred_r = 0.9 * y_true_r + 0.2 * jax.random.normal(k4, shape_r, dtype=jnp.float32)
    ref_r = ccc_loss_ref(y_pred_r, y_true_r)
    check(ccc_loss(y_pred_r, y_true_r), ref_r, "ragged")

    # 4) bf16 inputs (16-row sublane packing, in-kernel widening to f32).
    yp_bf = y_pred.astype(jnp.bfloat16)
    yt_bf = y_true.astype(jnp.bfloat16)
    ref_bf = ccc_loss_ref(yp_bf, yt_bf)
    check(ccc_loss(yp_bf, yt_bf), ref_bf, "bf16")

    print("KERNEL_OK")
</pallas_src>

<mosaic_0001>
module attributes {stable_mosaic.version = 11 : i64} {
  func.func @ccc_kernel(%arg0: i32, %arg1: memref<16x128xf32, #tpu.memory_space<vmem>>, %arg2: memref<16x128xf32, #tpu.memory_space<vmem>>, %arg3: memref<1x1xf32, #tpu.memory_space<smem>>, %arg4: memref<5x8x128xf32, #tpu.memory_space<vmem>>) attributes {dimension_semantics = [#tpu.dimension_semantics<arbitrary>], iteration_bounds = array<i64: 1>, scalar_prefetch = 0 : i64, scratch_operands = 1 : i64, tpu.core_type = #tpu.core_type<tc>, window_params = [{transform_indices = @transform_0, window_bounds = array<i64: 16, 128>}, {transform_indices = @transform_1, window_bounds = array<i64: 16, 128>}, {transform_indices = @transform_2, window_bounds = array<i64: 1, 1>}]} {
    %c0_i32 = arith.constant 0 : i32
    %0 = arith.cmpi eq, %arg0, %c0_i32 : i32
    %1 = arith.extui %0 : i1 to i32
    %c0_i32_0 = arith.constant 0 : i32
    %2 = arith.cmpi ne, %1, %c0_i32_0 : i32
    scf.if %2 {
      %cst_36 = arith.constant 0.000000e+00 : f32
      %51 = vector.broadcast %cst_36 : f32 to vector<5x8x128xf32>
      %c0_37 = arith.constant 0 : index
      %c0_38 = arith.constant 0 : index
      %c0_39 = arith.constant 0 : index
      %52 = vector.load %arg4[%c0_37, %c0_38, %c0_39] : memref<5x8x128xf32, #tpu.memory_space<vmem>>, vector<5x8x128xf32>
      tpu.vector_store %arg4[%c0_37, %c0_38, %c0_39], %51 {strides = array<i32>} : memref<5x8x128xf32, #tpu.memory_space<vmem>>, vector<5x8x128xf32>,
    } else {
    }
    %c0 = arith.constant 0 : index
    %c0_1 = arith.constant 0 : index
    %3 = vector.load %arg1[%c0, %c0_1] : memref<16x128xf32, #tpu.memory_space<vmem>>, vector<16x128xf32>
    %c0_2 = arith.constant 0 : index
    %c0_3 = arith.constant 0 : index
    %4 = vector.load %arg2[%c0_2, %c0_3] : memref<16x128xf32, #tpu.memory_space<vmem>>, vector<16x128xf32>
    %c0_4 = arith.constant 0 : index
    %c0_5 = arith.constant 0 : index
    %c0_6 = arith.constant 0 : index
    %5 = vector.load %arg4[%c0_4, %c0_5, %c0_6] : memref<5x8x128xf32, #tpu.memory_space<vmem>>, vector<1x8x128xf32>
    %6 = vector.shape_cast %5 : vector<1x8x128xf32> to vector<8x128xf32>
    %7 = vector.shape_cast %3 : vector<16x128xf32> to vector<2x8x128xf32>
    %cst = arith.constant dense<0.000000e+00> : vector<8x128xf32>
    %8 = vector.multi_reduction <add>, %7, %cst [0] : vector<2x8x128xf32> to vector<8x128xf32>
    %9 = arith.addf %6, %8 : vector<8x128xf32>
    %c0_7 = arith.constant 0 : index
    %c0_8 = arith.constant 0 : index
    %c0_9 = arith.constant 0 : index
    %10 = vector.load %arg4[%c0_7, %c0_8, %c0_9] : memref<5x8x128xf32, #tpu.memory_space<vmem>>, vector<1x8x128xf32>
    %11 = vector.shape_cast %10 : vector<1x8x128xf32> to vector<8x128xf32>
    %12 = vector.shape_cast %9 : vector<8x128xf32> to vector<1x8x128xf32>
    tpu.vector_store %arg4[%c0_7, %c0_8, %c0_9], %12 {strides = array<i32>} : memref<5x8x128xf32, #tpu.memory_space<vmem>>, vector<1x8x128xf32>,
    %c1 = arith.constant 1 : index
    %c0_10 = arith.constant 0 : index
    %c0_11 = arith.constant 0 : index
    %13 = vector.load %arg4[%c1, %c0_10, %c0_11] : memref<5x8x128xf32, #tpu.memory_space<vmem>>, vector<1x8x128xf32>
    %14 = vector.shape_cast %13 : vector<1x8x128xf32> to vector<8x128xf32>
    %15 = vector.shape_cast %4 : vector<16x128xf32> to vector<2x8x128xf32>
    %cst_12 = arith.constant dense<0.000000e+00> : vector<8x128xf32>
    %16 = vector.multi_reduction <add>, %15, %cst_12 [0] : vector<2x8x128xf32> to vector<8x128xf32>
    %17 = arith.addf %14, %16 : vector<8x128xf32>
    %c1_13 = arith.constant 1 : index
    %c0_14 = arith.constant 0 : index
    %c0_15 = arith.constant 0 : index
    %18 = vector.load %arg4[%c1_13, %c0_14, %c0_15] : memref<5x8x128xf32, #tpu.memory_space<vmem>>, vector<1x8x128xf32>
    %19 = vector.shape_cast %18 : vector<1x8x128xf32> to vector<8x128xf32>
    %20 = vector.shape_cast %17 : vector<8x128xf32> to vector<1x8x128xf32>
    tpu.vector_store %arg4[%c1_13, %c0_14, %c0_15], %20 {strides = array<i32>} : memref<5x8x128xf32, #tpu.memory_space<vmem>>, vector<1x8x128xf32>,
    %c2 = arith.constant 2 : index
    %c0_16 = arith.constant 0 : index
    %c0_17 = arith.constant 0 : index
    %21 = vector.load %arg4[%c2, %c0_16, %c0_17] : memref<5x8x128xf32, #tpu.memory_space<vmem>>, vector<1x8x128xf32>
    %22 = vector.shape_cast %21 : vector<1x8x128xf32> to vector<8x128xf32>
    %23 = arith.mulf %3, %3 : vector<16x128xf32>
    %24 = vector.shape_cast %23 : vector<16x128xf32> to vector<2x8x128xf32>
    %cst_18 = arith.constant dense<0.000000e+00> : vector<8x128xf32>
    %25 = vector.multi_reduction <add>, %24, %cst_18 [0] : vector<2x8x128xf32> to vector<8x128xf32>
    %26 = arith.addf %22, %25 : vector<8x128xf32>
    %c2_19 = arith.constant 2 : index
    %c0_20 = arith.constant 0 : index
    %c0_21 = arith.constant 0 : index
    %27 = vector.load %arg4[%c2_19, %c0_20, %c0_21] : memref<5x8x128xf32, #tpu.memory_space<vmem>>, vector<1x8x128xf32>
    %28 = vector.shape_cast %27 : vector<1x8x128xf32> to vector<8x128xf32>
    %29 = vector.shape_cast %26 : vector<8x128xf32> to vector<1x8x128xf32>
    tpu.vector_store %arg4[%c2_19, %c0_20, %c0_21], %29 {strides = array<i32>} : memref<5x8x128xf32, #tpu.memory_space<vmem>>, vector<1x8x128xf32>,
    %c3 = arith.constant 3 : index
    %c0_22 = arith.constant 0 : index
    %c0_23 = arith.constant 0 : index
    %30 = vector.load %arg4[%c3, %c0_22, %c0_23] : memref<5x8x128xf32, #tpu.memory_space<vmem>>, vector<1x8x128xf32>
    %31 = vector.shape_cast %30 : vector<1x8x128xf32> to vector<8x128xf32>
    %32 = arith.mulf %4, %4 : vector<16x128xf32>
    %33 = vector.shape_cast %32 : vector<16x128xf32> to vector<2x8x128xf32>
    %cst_24 = arith.constant dense<0.000000e+00> : vector<8x128xf32>
    %34 = vector.multi_reduction <add>, %33, %cst_24 [0] : vector<2x8x128xf32> to vector<8x128xf32>
    %35 = arith.addf %31, %34 : vector<8x128xf32>
    %c3_25 = arith.constant 3 : index
    %c0_26 = arith.constant 0 : index
    %c0_27 = arith.constant 0 : index
    %36 = vector.load %arg4[%c3_25, %c0_26, %c0_27] : memref<5x8x128xf32, #tpu.memory_space<vmem>>, vector<1x8x128xf32>
    %37 = vector.shape_cast %36 : vector<1x8x128xf32> to vector<8x128xf32>
    %38 = vector.shape_cast %35 : vector<8x128xf32> to vector<1x8x128xf32>
    tpu.vector_store %arg4[%c3_25, %c0_26, %c0_27], %38 {strides = array<i32>} : memref<5x8x128xf32, #tpu.memory_space<vmem>>, vector<1x8x128xf32>,
    %c4 = arith.constant 4 : index
    %c0_28 = arith.constant 0 : index
    %c0_29 = arith.constant 0 : index
    %39 = vector.load %arg4[%c4, %c0_28, %c0_29] : memref<5x8x128xf32, #tpu.memory_space<vmem>>, vector<1x8x128xf32>
    %40 = vector.shape_cast %39 : vector<1x8x128xf32> to vector<8x128xf32>
    %41 = arith.mulf %3, %4 : vector<16x128xf32>
    %42 = vector.shape_cast %41 : vector<16x128xf32> to vector<2x8x128xf32>
    %cst_30 = arith.constant dense<0.000000e+00> : vector<8x128xf32>
    %43 = vector.multi_reduction <add>, %42, %cst_30 [0] : vector<2x8x128xf32> to vector<8x128xf32>
    %44 = arith.addf %40, %43 : vector<8x128xf32>
    %c4_31 = arith.constant 4 : index
    %c0_32 = arith.constant 0 : index
    %c0_33 = arith.constant 0 : index
    %45 = vector.load %arg4[%c4_31, %c0_32, %c0_33] : memref<5x8x128xf32, #tpu.memory_space<vmem>>, vector<1x8x128xf32>
    %46 = vector.shape_cast %45 : vector<1x8x128xf32> to vector<8x128xf32>
    %47 = vector.shape_cast %44 : vector<8x128xf32> to vector<1x8x128xf32>
    tpu.vector_store %arg4[%c4_31, %c0_32, %c0_33], %47 {strides = array<i32>} : memref<5x8x128xf32, #tpu.memory_space<vmem>>, vector<1x8x128xf32>,
    %c0_i32_34 = arith.constant 0 : i32
    %48 = arith.cmpi eq, %arg0, %c0_i32_34 : i32
    %49 = arith.extui %48 : i1 to i32
    %c0_i32_35 = arith.constant 0 : i32
    %50 = arith.cmpi ne, %49, %c0_i32_35 : i32
    scf.if %50 {
      %c0_36 = arith.constant 0 : index
      %c0_37 = arith.constant 0 : index
      %c0_38 = arith.constant 0 : index
      %51 = vector.load %arg4[%c0_36, %c0_37, %c0_38] : memref<5x8x128xf32, #tpu.memory_space<vmem>>, vector<1x8x128xf32>
      %52 = vector.shape_cast %51 : vector<1x8x128xf32> to vector<8x128xf32>
      %53 = vector.shape_cast %52 : vector<8x128xf32> to vector<1x8x128xf32>
      %cst_39 = arith.constant dense<0.000000e+00> : vector<1xf32>
      %54 = vector.multi_reduction <add>, %53, %cst_39 [1, 2] : vector<1x8x128xf32> to vector<1xf32>
      %55 = vector.shape_cast %54 : vector<1xf32> to vector<1x1x1xf32>
      %56 = vector.extract %55[0, 0, 0] : f32 from vector<1x1x1xf32>
      %c1_40 = arith.constant 1 : index
      %c0_41 = arith.constant 0 : index
      %c0_42 = arith.constant 0 : index
      %57 = vector.load %arg4[%c1_40, %c0_41, %c0_42] : memref<5x8x128xf32, #tpu.memory_space<vmem>>, vector<1x8x128xf32>
      %58 = vector.shape_cast %57 : vector<1x8x128xf32> to vector<8x128xf32>
      %59 = vector.shape_cast %58 : vector<8x128xf32> to vector<1x8x128xf32>
      %cst_43 = arith.constant dense<0.000000e+00> : vector<1xf32>
      %60 = vector.multi_reduction <add>, %59, %cst_43 [1, 2] : vector<1x8x128xf32> to vector<1xf32>
      %61 = vector.shape_cast %60 : vector<1xf32> to vector<1x1x1xf32>
      %62 = vector.extract %61[0, 0, 0] : f32 from vector<1x1x1xf32>
      %c2_44 = arith.constant 2 : index
      %c0_45 = arith.constant 0 : index
      %c0_46 = arith.constant 0 : index
      %63 = vector.load %arg4[%c2_44, %c0_45, %c0_46] : memref<5x8x128xf32, #tpu.memory_space<vmem>>, vector<1x8x128xf32>
      %64 = vector.shape_cast %63 : vector<1x8x128xf32> to vector<8x128xf32>
      %65 = vector.shape_cast %64 : vector<8x128xf32> to vector<1x8x128xf32>
      %cst_47 = arith.constant dense<0.000000e+00> : vector<1xf32>
      %66 = vector.multi_reduction <add>, %65, %cst_47 [1, 2] : vector<1x8x128xf32> to vector<1xf32>
      %67 = vector.shape_cast %66 : vector<1xf32> to vector<1x1x1xf32>
      %68 = vector.extract %67[0, 0, 0] : f32 from vector<1x1x1xf32>
      %c3_48 = arith.constant 3 : index
      %c0_49 = arith.constant 0 : index
      %c0_50 = arith.constant 0 : index
      %69 = vector.load %arg4[%c3_48, %c0_49, %c0_50] : memref<5x8x128xf32, #tpu.memory_space<vmem>>, vector<1x8x128xf32>
      %70 = vector.shape_cast %69 : vector<1x8x128xf32> to vector<8x128xf32>
      %71 = vector.shape_cast %70 : vector<8x128xf32> to vector<1x8x128xf32>
      %cst_51 = arith.constant dense<0.000000e+00> : vector<1xf32>
      %72 = vector.multi_reduction <add>, %71, %cst_51 [1, 2] : vector<1x8x128xf32> to vector<1xf32>
      %73 = vector.shape_cast %72 : vector<1xf32> to vector<1x1x1xf32>
      %74 = vector.extract %73[0, 0, 0] : f32 from vector<1x1x1xf32>
      %c4_52 = arith.constant 4 : index
      %c0_53 = arith.constant 0 : index
      %c0_54 = arith.constant 0 : index
      %75 = vector.load %arg4[%c4_52, %c0_53, %c0_54] : memref<5x8x128xf32, #tpu.memory_space<vmem>>, vector<1x8x128xf32>
      %76 = vector.shape_cast %75 : vector<1x8x128xf32> to vector<8x128xf32>
      %77 = vector.shape_cast %76 : vector<8x128xf32> to vector<1x8x128xf32>
      %cst_55 = arith.constant dense<0.000000e+00> : vector<1xf32>
      %78 = vector.multi_reduction <add>, %77, %cst_55 [1, 2] : vector<1x8x128xf32> to vector<1xf32>
      %79 = vector.shape_cast %78 : vector<1xf32> to vector<1x1x1xf32>
      %80 = vector.extract %79[0, 0, 0] : f32 from vector<1x1x1xf32>
      %cst_56 = arith.constant 4.8828125E-4 : f32
      %81 = arith.mulf %56, %cst_56 : f32
      %cst_57 = arith.constant 4.8828125E-4 : f32
      %82 = arith.mulf %62, %cst_57 : f32
      %cst_58 = arith.constant 4.8828125E-4 : f32
      %83 = arith.mulf %68, %cst_58 : f32
      %84 = arith.mulf %81, %81 : f32
      %85 = arith.subf %83, %84 : f32
      %cst_59 = arith.constant 4.8828125E-4 : f32
      %86 = arith.mulf %74, %cst_59 : f32
      %87 = arith.mulf %82, %82 : f32
      %88 = arith.subf %86, %87 : f32
      %cst_60 = arith.constant 4.8828125E-4 : f32
      %89 = arith.mulf %80, %cst_60 : f32
      %90 = arith.mulf %81, %82 : f32
      %91 = arith.subf %89, %90 : f32
      %cst_61 = arith.constant 2.000000e+00 : f32
      %92 = arith.mulf %cst_61, %91 : f32
      %93 = arith.addf %88, %85 : f32
      %94 = arith.subf %82, %81 : f32
      %95 = arith.mulf %94, %94 : f32
      %96 = arith.addf %93, %95 : f32
      %cst_62 = arith.constant 9.99999993E-9 : f32
      %97 = arith.addf %96, %cst_62 : f32
      %98 = arith.divf %92, %97 : f32
      %cst_63 = arith.constant 1.000000e+00 : f32
      %99 = arith.subf %cst_63, %98 : f32
      %c0_64 = arith.constant 0 : index
      %c0_65 = arith.constant 0 : index
      %100 = memref.load %arg3[%c0_64, %c0_65] : memref<1x1xf32, #tpu.memory_space<smem>>
      memref.store %99, %arg3[%c0_64, %c0_65] : memref<1x1xf32, #tpu.memory_space<smem>>
    } else {
    }
    return
  }
  func.func @transform_0(%arg0: i32) -> (i32, i32) {
    %c0_i32 = arith.constant 0 : i32
    %c0_i32_0 = arith.constant 0 : i32
    return %arg0, %c0_i32 : i32, i32
  }
  func.func @transform_1(%arg0: i32) -> (i32, i32) {
    %c0_i32 = arith.constant 0 : i32
    %c0_i32_0 = arith.constant 0 : i32
    return %arg0, %c0_i32 : i32, i32
  }
  func.func @transform_2(%arg0: i32) -> (i32, i32) {
    %c0_i32 = arith.constant 0 : i32
    %c0_i32_0 = arith.constant 0 : i32
    %c0_i32_1 = arith.constant 0 : i32
    return %c0_i32, %c0_i32_0 : i32, i32
  }
}

</mosaic_0001>

<llo_original>
// kernel: tpu_custom_call.1
$region0: #{tpu_custom_call.1}
  #allocation0 [shape = 'u32[]', space=smem, size = 0x4, offset = 0x4, fixed_abs, tag = 'smem constant byte address 0x4 - core index']
  #allocation1 [shape = 'u32[144,128]{1,0:T(1,128)}', space=vmem, size = 0x12000, scoped, tag = 'internal scratch']
  #allocation2 [shape = 'f32[5,8,128]{2,1,0:T(8,128)}', space=vmem, size = 0x5000, scoped, tag = 'scratch operand']
  %s0 = inlined_call_operand.hbm [shape: f32[16,128], index: 0, kind: input, shape index: {}]
  %s1 = inlined_call_operand.hbm [shape: f32[16,128], index: 1, kind: input, shape index: {}]
  %s2 = inlined_call_operand.hbm [shape: f32[1,1], index: 2, kind: output, shape index: {}]
  %s3 = sld [smem:[#allocation0]]
  $region34: #{tpu_custom_call.1} parent=0
    _
  %s5 = ssub.s32 1, %s3
  %s6 = scalar_select 0, %s5, %s3
  $region1: #{tpu_custom_call.1} parent=0
    #allocation3 [shape = 'u8[8192]{0}', space=vmem, size = 0x2000, scoped, tag = 'input window, operand 0, single buffered']
    #allocation4 [shape = 's32[1]{0}', space=sflag, size = 0x4, scoped, tag = 'scoped memory for tpu_custom_call.1']
    #allocation5 [shape = 's32[1]{0}', space=sflag, size = 0x4, scoped, tag = 'scoped memory for tpu_custom_call.1']
    #allocation6 [shape = 'u8[8192]{0}', space=vmem, size = 0x2000, scoped, tag = 'input window, operand 1, single buffered']
    #allocation7 [shape = 's32[1]{0}', space=sflag, size = 0x4, scoped, tag = 'scoped memory for tpu_custom_call.1']
    #allocation8 [shape = 'u8[512]{0}', space=smem, size = 0x200, scoped, tag = 'output window, operand 0, single buffered']
    %7 = vsyncpa [#allocation4], 0
    %8 = vsyncpa [#allocation7], 0
    %9 = vsyncpa [#allocation5], 0
    // Predicated region
    $region2: #{tpu_custom_call.1} parent=1 // pred_check
      _
    $region3: #{tpu_custom_call.1} parent=1 // pred_check_branch
      %11 = sbr.rel (0) target = $region5
    $region4: #{tpu_custom_call.1} parent=1 // pred_region
      %s13 = ssub.s32 256, 256
      %14 = vsyncadd [#allocation4], %s13
      %s15 = sshll.u32 [#allocation3], 4
      %s16 = int_to_ptr.vmem [resolvable:$true] %s15
      %21 = dma.hbm_to_vmem [thread:$0]  %s0, 256, %s16, [#allocation4], 128, 128, 8
    $region5: #{tpu_custom_call.1} parent=1 // pred_fallthru
      _
    // Predicated region
    $region6: #{tpu_custom_call.1} parent=1 // pred_check
      _
    $region7: #{tpu_custom_call.1} parent=1 // pred_check_branch
      %23 = sbr.rel (0) target = $region9
    $region8: #{tpu_custom_call.1} parent=1 // pred_region
      %s25 = ssub.s32 256, 256
      %26 = vsyncadd [#allocation7], %s25
      %s27 = sshll.u32 [#allocation6], 4
      %s28 = int_to_ptr.vmem [resolvable:$true] %s27
      %33 = dma.hbm_to_vmem [thread:$0]  %s1, 256, %s28, [#allocation7], 128, 128, 8
    $region9: #{tpu_custom_call.1} parent=1 // pred_fallthru
      _
    // Predicated region
    $region10: #{tpu_custom_call.1} parent=1 // pred_check
      _
    $region11: #{tpu_custom_call.1} parent=1 // pred_check_branch
      %35 = sbr.rel (0) target = $region13
    $region12: #{tpu_custom_call.1} parent=1 // pred_region
      %36 = dma.done [#allocation4], 256
    $region13: #{tpu_custom_call.1} parent=1 // pred_fallthru
      _
    // Predicated region
    $region14: #{tpu_custom_call.1} parent=1 // pred_check
      _
    $region15: #{tpu_custom_call.1} parent=1 // pred_check_branch
      %38 = sbr.rel (0) target = $region17
    $region16: #{tpu_custom_call.1} parent=1 // pred_region
      %39 = dma.done [#allocation7], 256
    $region17: #{tpu_custom_call.1} parent=1 // pred_fallthru
      _
    %p40 = scmp.eq.s32.totalorder 0, 0
    // Predicated region
    $region18: #{tpu_custom_call.1} parent=1 // pred_check
      %p41 = pneg %p40
    $region19: #{tpu_custom_call.1} parent=1 // pred_check_branch
      %43 = sbr.rel (%p41) target = $region21
    $region20: #{tpu_custom_call.1} parent=1 // pred_region
      %44 = vst [vmem:[#allocation2] sm:$0xff] 0.0
      %45 = vst [vmem:[#allocation2 + $0x8] sm:$0xff] 0.0
      %46 = vst [vmem:[#allocation2 + $0x10] sm:$0xff] 0.0
      %47 = vst [vmem:[#allocation2 + $0x18] sm:$0xff] 0.0
      %48 = vst [vmem:[#allocation2 + $0x20] sm:$0xff] 0.0
    $region21: #{tpu_custom_call.1} parent=1 // pred_fallthru
      _
    %v49 = vld [vmem:[#allocation3] sm:$0xff]
    %v50 = vld [vmem:[#allocation3 + $0x8] sm:$0xff]
    %v51 = vld [vmem:[#allocation6] sm:$0xff]
    %v52 = vld [vmem:[#allocation6 + $0x8] sm:$0xff]
    %v53 = vld [vmem:[#allocation2] sm:$0xff]
    %v54 = vadd.f32 %v49, %v50
    %v55 = vadd.f32 %v53, %v54
    %56 = vst [vmem:[#allocation2] sm:$0xff] %v55
    %s57 = scalar_lea.vmem [#allocation2], 8
    %v58 = vld [vmem:[%s57] sm:$0xff]
    %v59 = vadd.f32 %v51, %v52
    %v60 = vadd.f32 %v58, %v59
    %61 = vst [vmem:[%s57] sm:$0xff] %v60
    %s62 = scalar_lea.vmem [#allocation2], 16
    %v63 = vld [vmem:[%s62] sm:$0xff]
    %v64 = vmul.f32 %v49, %v49
    %v65 = vmul.f32 %v50, %v50
    %v66 = vadd.f32 %v64, %v65
    %v67 = vadd.f32 %v63, %v66
    %68 = vst [vmem:[%s62] sm:$0xff] %v67
    %s69 = scalar_lea.vmem [#allocation2], 24
    %v70 = vld [vmem:[%s69] sm:$0xff]
    %v71 = vmul.f32 %v51, %v51
    %v72 = vmul.f32 %v52, %v52
    %v73 = vadd.f32 %v71, %v72
    %v74 = vadd.f32 %v70, %v73
    %75 = vst [vmem:[%s69] sm:$0xff] %v74
    %s76 = scalar_lea.vmem [#allocation2], 32
    %v77 = vld [vmem:[%s76] sm:$0xff]
    %v78 = vmul.f32 %v49, %v51
    %v79 = vmul.f32 %v50, %v52
    %v80 = vadd.f32 %v78, %v79
    %v81 = vadd.f32 %v77, %v80
    %82 = vst [vmem:[%s76] sm:$0xff] %v81
    // Predicated region
    $region22: #{tpu_custom_call.1} parent=1 // pred_check
      %p83 = pneg %p40
    $region23: #{tpu_custom_call.1} parent=1 // pred_check_branch
      %85 = sbr.rel (%p83) target = $region25
    $region24: #{tpu_custom_call.1} parent=1 // pred_region
      %v86 = vld [vmem:[#allocation2] sm:$0xff]
      %87 = vadd.xlane.f32.xlu0 %v86
      %v88 = vpop.xlane.xlu0 %87
      %v89 = vrot.slane %v88, 4
      %v90 = vadd.f32 %v88, %v89
      %v91 = vrot.slane %v90, 2
      %v92 = vadd.f32 %v90, %v91
      %v93 = vrot.slane %v92, 1
      %v94 = vadd.f32 %v92, %v93
      %s95 = vtos %v94
      %v96 = vld [vmem:[%s57] sm:$0xff]
      %97 = vadd.xlane.f32.xlu0 %v96
      %v98 = vpop.xlane.xlu0 %97
      %v99 = vrot.slane %v98, 4
      %v100 = vadd.f32 %v98, %v99
      %v101 = vrot.slane %v100, 2
      %v102 = vadd.f32 %v100, %v101
      %v103 = vrot.slane %v102, 1
      %v104 = vadd.f32 %v102, %v103
      %s105 = vtos %v104
      %v106 = vld [vmem:[%s62] sm:$0xff]
      %107 = vadd.xlane.f32.xlu0 %v106
      %v108 = vpop.xlane.xlu0 %107
      %v109 = vrot.slane %v108, 4
      %v110 = vadd.f32 %v108, %v109
      %v111 = vrot.slane %v110, 2
      %v112 = vadd.f32 %v110, %v111
      %v113 = vrot.slane %v112, 1
      %v114 = vadd.f32 %v112, %v113
      %s115 = vtos %v114
      %v116 = vld [vmem:[%s69] sm:$0xff]
      %117 = vadd.xlane.f32.xlu0 %v116
      %v118 = vpop.xlane.xlu0 %117
      %v119 = vrot.slane %v118, 4
      %v120 = vadd.f32 %v118, %v119
      %v121 = vrot.slane %v120, 2
      %v122 = vadd.f32 %v120, %v121
      %v123 = vrot.slane %v122, 1
      %v124 = vadd.f32 %v122, %v123
      %s125 = vtos %v124
      %v126 = vld [vmem:[%s76] sm:$0xff]
      %127 = vadd.xlane.f32.xlu0 %v126
      %v128 = vpop.xlane.xlu0 %127
      %v129 = vrot.slane %v128, 4
      %v130 = vadd.f32 %v128, %v129
      %v131 = vrot.slane %v130, 2
      %v132 = vadd.f32 %v130, %v131
      %v133 = vrot.slane %v132, 1
      %v134 = vadd.f32 %v132, %v133
      %s135 = vtos %v134
      %s136 = smul.f32 %s95, 0.00048828125
      %s137 = smul.f32 %s105, 0.00048828125
      %s138 = smul.f32 %s115, 0.00048828125
      %s139 = smul.f32 %s136, %s136
      %s140 = ssub.f32 %s138, %s139
      %s141 = smul.f32 %s125, 0.00048828125
      %s142 = smul.f32 %s137, %s137
      %s143 = ssub.f32 %s141, %s142
      %s144 = smul.f32 %s135, 0.00048828125
      %s145 = smul.f32 %s136, %s137
      %s146 = ssub.f32 %s144, %s145
      %s147 = smul.f32 %s146, 2.0
      %s148 = sadd.f32 %s143, %s140
      %s149 = ssub.f32 %s137, %s136
      %s150 = smul.f32 %s149, %s149
      %s151 = sadd.f32 %s148, %s150
      %s152 = sadd.f32 %s151, 1e-08
      %v153 = vstv %s152
      %v154 = vrcp.pop %v153
      %s155 = vtos %v154
      %s156 = smul.f32 %s147, %s155
      %s157 = ssub.f32 1.0, %s156
      %s158 = scalar_lea.smem [#allocation8], 0
      %159 = sst [smem:[%s158]] %s157
    $region25: #{tpu_custom_call.1} parent=1 // pred_fallthru
      _
    // Predicated region
    $region26: #{tpu_custom_call.1} parent=1 // pred_check
      _
    $region27: #{tpu_custom_call.1} parent=1 // pred_check_branch
      %161 = sbr.rel (0) target = $region29
    $region28: #{tpu_custom_call.1} parent=1 // pred_region
      %s163 = ssub.s32 16, 16
      %164 = vsyncadd [#allocation5], %s163
      %167 = dma.smem_to_hbm [#allocation8], 16, %s2, [#allocation5]
    $region29: #{tpu_custom_call.1} parent=1 // pred_fallthru
      _
    // Predicated region
    $region30: #{tpu_custom_call.1} parent=1 // pred_check
      _
    $region31: #{tpu_custom_call.1} parent=1 // pred_check_branch
      %169 = sbr.rel (0) target = $region33
    $region32: #{tpu_custom_call.1} parent=1 // pred_region
      %170 = dma.done [#allocation5], 16
    $region33: #{tpu_custom_call.1} parent=1 // pred_fallthru
      _
    %171 = sfence
    %172 = vsyncpa [#allocation4], 1
    %173 = vsyncpa [#allocation7], 1
    %174 = vsyncpa [#allocation5], 1

</llo_original>
